<compile_context>
chip_gen: v7x
topology: tpu7x:2x2x1
jax: 0.10.0
libtpu: 0.0.40
codegen_flags: <defaults>
</compile_context>

<pallas_src>
import functools

import jax
import jax.numpy as jnp
from jax.experimental import pallas as pl
from jax.experimental.pallas import tpu as pltpu

_LANE = 128       # f32 lane width   (last dim)
_SUBLANE = 8      # f32 sublane size (second-to-last dim)
_BATCH_TILE = 256  # batch block size once the gridded path kicks in


def _round_up(n, m):
    return ((n + m - 1) // m) * m


def _fused_mlp_kernel(x_ref, w_ref, b_ref, o_ref, *, n_layers, sublane_reps):
    """Whole-MLP body.  x_ref:(bm,MAXW) f32, w_ref:(L,MAXW,MAXW) f32/bf16,
    b_ref:(L,8,MAXW) f32 (pre-broadcast over sublanes), o_ref:(bm,MAXW) f32.

    All tiles are (8,128)-aligned; every matmul hits the MXU with dense
    128-wide tiles and intermediate activations never leave VMEM/vregs.
    Zero padding is exact: padded K rows / N cols contribute 0, so padded
    feature columns stay 0 through every layer.
    """
    h = x_ref[...]                                          # f32 activations
    for i in range(n_layers):                               # static unroll
        w = w_ref[i]                                        # (MAXW, MAXW)
        # bf16 (if enabled) only touches the MXU operands; accumulate in f32.
        h = jnp.dot(h.astype(w.dtype), w, preferred_element_type=jnp.float32)
        bias = b_ref[i]                                     # (8, MAXW) f32
        if sublane_reps > 1:                                # only in gridded path
            bias = jnp.tile(bias, (sublane_reps, 1))
        h = h + bias
        if i < n_layers - 1:                                # hidden layers only
            h = jnp.maximum(h, 0.0)
    o_ref[...] = h                                          # f32, no cast


def make_mlp_forward(params, *, use_bf16=False):
    """Prepare (pad/cast/stack) params once and return a jitted forward(x).

    params: list of (w, b) with w laid out (in_features, out_features)
            (i.e. PyTorch nn.Linear weight TRANSPOSED).
    """
    # --- weight-layout sanity checks (catches PyTorch-native (out,in)) ------
    for i, (w, b) in enumerate(params):
        assert w.ndim == 2 and b.ndim == 1
        assert b.shape[0] == w.shape[1], (
            f"weights must be (in_features, out_features); layer {i} got "
            f"w{tuple(w.shape)} with bias{tuple(b.shape)}")
        if i > 0:
            assert w.shape[0] == params[i - 1][0].shape[1], (
                f"layer {i} in_features does not match layer {i-1} out_features")

    n_layers = len(params)
    in_dim = params[0][0].shape[0]
    n_classes = params[-1][0].shape[1]
    dims = [in_dim] + [w.shape[1] for (w, _) in params]
    maxw = max(_round_up(d, _LANE) for d in dims)
    w_dtype = jnp.bfloat16 if use_bf16 else jnp.float32

    # --- pad & stack params ONCE (not in the per-call path) -----------------
    w_stack = jnp.stack([
        jnp.pad(jnp.asarray(w).astype(w_dtype),
                ((0, maxw - w.shape[0]), (0, maxw - w.shape[1])))
        for (w, _) in params])                               # (L, MAXW, MAXW)
    b_stack = jnp.stack([
        jnp.broadcast_to(
            jnp.pad(jnp.asarray(b).astype(jnp.float32),
                    (0, maxw - b.shape[0]))[None, :],
            (_SUBLANE, maxw))
        for (_, b) in params])                               # (L, 8, MAXW)

    def _call(x_pad, b_pad):
        flops = 2 * b_pad * maxw * maxw * n_layers
        bytes_accessed = int(x_pad.size * 4
                             + w_stack.size * w_stack.dtype.itemsize
                             + b_stack.size * 4
                             + b_pad * maxw * 4)
        if b_pad <= _BATCH_TILE:
            # Small batch: no grid, whole problem resident in VMEM (~200 KiB),
            # single invocation; output store is a lane-dense unmasked vst.
            kernel = functools.partial(_fused_mlp_kernel, n_layers=n_layers,
                                       sublane_reps=b_pad // _SUBLANE)
            return pl.pallas_call(
                kernel,
                out_shape=jax.ShapeDtypeStruct((b_pad, maxw), jnp.float32),
                in_specs=[pl.BlockSpec(memory_space=pltpu.MemorySpace.VMEM)] * 3,
                out_specs=pl.BlockSpec(memory_space=pltpu.MemorySpace.VMEM),
                cost_estimate=pl.CostEstimate(
                    flops=flops, transcendentals=0,
                    bytes_accessed=bytes_accessed),
            )(x_pad, w_stack, b_stack)

        # Large batch: tile over batch, parallel axis (uses both v7x TCs),
        # explicit VMEM limit (v7x has 64 MiB physical / 32 MiB scoped).
        kernel = functools.partial(_fused_mlp_kernel, n_layers=n_layers,
                                   sublane_reps=_BATCH_TILE // _SUBLANE)
        return pl.pallas_call(
            kernel,
            out_shape=jax.ShapeDtypeStruct((b_pad, maxw), jnp.float32),
            grid_spec=pltpu.PrefetchScalarGridSpec(
                num_scalar_prefetch=0,
                grid=(b_pad // _BATCH_TILE,),
                in_specs=[
                    pl.BlockSpec((_BATCH_TILE, maxw), lambda i: (i, 0)),
                    pl.BlockSpec((n_layers, maxw, maxw), lambda i: (0, 0, 0)),
                    pl.BlockSpec((n_layers, _SUBLANE, maxw),
                                 lambda i: (0, 0, 0)),
                ],
                out_specs=pl.BlockSpec((_BATCH_TILE, maxw), lambda i: (i, 0))),
            compiler_params=pltpu.CompilerParams(
                dimension_semantics=("parallel",),
                vmem_limit_bytes=32 * 1024 * 1024),
            cost_estimate=pl.CostEstimate(
                flops=flops, transcendentals=0, bytes_accessed=bytes_accessed),
        )(x_pad, w_stack, b_stack)

    @jax.jit
    def forward(x):
        bs = x.shape[0]
        h = x.reshape(bs, -1).astype(jnp.float32)            # X.reshape(bs, -1)
        assert h.shape[1] == in_dim, (
            f"flattened input dim {h.shape[1]} != first layer in_features {in_dim}")
        b_pad = _round_up(max(bs, _SUBLANE), _SUBLANE)
        if b_pad > _BATCH_TILE:
            b_pad = _round_up(b_pad, _BATCH_TILE)
        x_pad = jnp.pad(h, ((0, b_pad - bs), (0, maxw - in_dim)))
        y_pad = _call(x_pad, b_pad)
        # NOTE: padded batch rows carry relu(bias)·W garbage — always slice.
        return y_pad[:bs, :n_classes]

    return forward


def init_mlp_params(key, input_size, hidden_units, n_classes):
    """nn.Linear-style init; weights stored as (in, out) (pre-transposed)."""
    n_units = [input_size] + list(hidden_units) + [n_classes]
    params = []
    for in_u, out_u in zip(n_units[:-1], n_units[1:]):
        key, kw, kb = jax.random.split(key, 3)
        bound = 1.0 / jnp.sqrt(jnp.float32(in_u))
        w = jax.random.uniform(kw, (in_u, out_u), jnp.float32, -bound, bound)
        b = jax.random.uniform(kb, (out_u,), jnp.float32, -bound, bound)
        params.append((w, b))
    return params


def mlp_forward_ref(x, params):
    """Pure-JAX reference for correctness checking."""
    bs = x.shape[0]
    h = x.reshape(bs, -1)
    n_layers = len(params)
    for i, (w, b) in enumerate(params):
        h = h @ w + b
        if i < n_layers - 1:
            h = jnp.maximum(h, 0.0)
    return h


if __name__ == "__main__":
    # Matches MLPModel(input_size=64, hidden_units=[32,16], n_classes=10,
    # activation=nn.ReLU) with a (2, 4, 4, 4) input.
    batch = 2
    c, hgt, wdt = 4, 4, 4
    input_size = c * hgt * wdt          # 64
    hidden_units = [32, 16]
    n_classes = 10

    key = jax.random.PRNGKey(0)
    key, kx = jax.random.split(key)
    x = jax.random.normal(kx, (batch, c, hgt, wdt), jnp.float32)
    params = init_mlp_params(key, input_size, hidden_units, n_classes)

    ref = mlp_forward_ref(x, params)

    # f32 path (tight tolerance)
    fwd = make_mlp_forward(params)
    out = jax.block_until_ready(fwd(x))
    assert out.shape == (batch, n_classes)
    assert jnp.allclose(out, ref, atol=1e-5, rtol=1e-5)

    # bf16-weight MXU path for v6e/v7x (relaxed tolerance)
    fwd_bf16 = make_mlp_forward(params, use_bf16=True)
    out_bf16 = jax.block_until_ready(fwd_bf16(x))
    assert out_bf16.shape == (batch, n_classes)
    assert jnp.allclose(out_bf16, ref, atol=2e-2, rtol=2e-2)

    print("KERNEL_OK")
</pallas_src>

<mosaic_0001>
module attributes {stable_mosaic.version = 11 : i64} {
  func.func @_fused_mlp_kernel(%arg0: memref<8x128xf32, #tpu.memory_space<vmem>>, %arg1: memref<3x128x128xf32, #tpu.memory_space<vmem>>, %arg2: memref<3x8x128xf32, #tpu.memory_space<vmem>>, %arg3: memref<8x128xf32, #tpu.memory_space<vmem>>) attributes {dimension_semantics = [], scalar_prefetch = 0 : i64, scratch_operands = 0 : i64, tpu.core_type = #tpu.core_type<tc>} {
    %c0 = arith.constant 0 : index
    %c0_0 = arith.constant 0 : index
    %0 = vector.load %arg0[%c0, %c0_0] : memref<8x128xf32, #tpu.memory_space<vmem>>, vector<8x128xf32>
    %c0_1 = arith.constant 0 : index
    %c0_2 = arith.constant 0 : index
    %c0_3 = arith.constant 0 : index
    %1 = vector.load %arg1[%c0_1, %c0_2, %c0_3] : memref<3x128x128xf32, #tpu.memory_space<vmem>>, vector<1x128x128xf32>
    %2 = vector.shape_cast %1 : vector<1x128x128xf32> to vector<128x128xf32>
    %cst = arith.constant dense<0.000000e+00> : vector<8x128xf32>
    %3 = tpu.matmul %0, %2, %cst {dimension_numbers = #tpu.dot_dimension_numbers<[1], [0], [0], [1], [0, 0, 1, 1], [], []>} : vector<8x128xf32>, vector<128x128xf32>, vector<8x128xf32> -> vector<8x128xf32>
    %c0_4 = arith.constant 0 : index
    %c0_5 = arith.constant 0 : index
    %c0_6 = arith.constant 0 : index
    %4 = vector.load %arg2[%c0_4, %c0_5, %c0_6] : memref<3x8x128xf32, #tpu.memory_space<vmem>>, vector<1x8x128xf32>
    %5 = vector.shape_cast %4 : vector<1x8x128xf32> to vector<8x128xf32>
    %6 = arith.addf %3, %5 : vector<8x128xf32>
    %cst_7 = arith.constant 0.000000e+00 : f32
    %7 = vector.broadcast %cst_7 : f32 to vector<8x128xf32>
    %8 = arith.maximumf %6, %7 : vector<8x128xf32>
    %c1 = arith.constant 1 : index
    %c0_8 = arith.constant 0 : index
    %c0_9 = arith.constant 0 : index
    %9 = vector.load %arg1[%c1, %c0_8, %c0_9] : memref<3x128x128xf32, #tpu.memory_space<vmem>>, vector<1x128x128xf32>
    %10 = vector.shape_cast %9 : vector<1x128x128xf32> to vector<128x128xf32>
    %cst_10 = arith.constant dense<0.000000e+00> : vector<8x128xf32>
    %11 = tpu.matmul %8, %10, %cst_10 {dimension_numbers = #tpu.dot_dimension_numbers<[1], [0], [0], [1], [0, 0, 1, 1], [], []>} : vector<8x128xf32>, vector<128x128xf32>, vector<8x128xf32> -> vector<8x128xf32>
    %c1_11 = arith.constant 1 : index
    %c0_12 = arith.constant 0 : index
    %c0_13 = arith.constant 0 : index
    %12 = vector.load %arg2[%c1_11, %c0_12, %c0_13] : memref<3x8x128xf32, #tpu.memory_space<vmem>>, vector<1x8x128xf32>
    %13 = vector.shape_cast %12 : vector<1x8x128xf32> to vector<8x128xf32>
    %14 = arith.addf %11, %13 : vector<8x128xf32>
    %cst_14 = arith.constant 0.000000e+00 : f32
    %15 = vector.broadcast %cst_14 : f32 to vector<8x128xf32>
    %16 = arith.maximumf %14, %15 : vector<8x128xf32>
    %c2 = arith.constant 2 : index
    %c0_15 = arith.constant 0 : index
    %c0_16 = arith.constant 0 : index
    %17 = vector.load %arg1[%c2, %c0_15, %c0_16] : memref<3x128x128xf32, #tpu.memory_space<vmem>>, vector<1x128x128xf32>
    %18 = vector.shape_cast %17 : vector<1x128x128xf32> to vector<128x128xf32>
    %cst_17 = arith.constant dense<0.000000e+00> : vector<8x128xf32>
    %19 = tpu.matmul %16, %18, %cst_17 {dimension_numbers = #tpu.dot_dimension_numbers<[1], [0], [0], [1], [0, 0, 1, 1], [], []>} : vector<8x128xf32>, vector<128x128xf32>, vector<8x128xf32> -> vector<8x128xf32>
    %c2_18 = arith.constant 2 : index
    %c0_19 = arith.constant 0 : index
    %c0_20 = arith.constant 0 : index
    %20 = vector.load %arg2[%c2_18, %c0_19, %c0_20] : memref<3x8x128xf32, #tpu.memory_space<vmem>>, vector<1x8x128xf32>
    %21 = vector.shape_cast %20 : vector<1x8x128xf32> to vector<8x128xf32>
    %22 = arith.addf %19, %21 : vector<8x128xf32>
    %c0_21 = arith.constant 0 : index
    %c0_22 = arith.constant 0 : index
    %23 = vector.load %arg3[%c0_21, %c0_22] : memref<8x128xf32, #tpu.memory_space<vmem>>, vector<8x128xf32>
    tpu.vector_store %arg3[%c0_21, %c0_22], %22 {strides = array<i32>} : memref<8x128xf32, #tpu.memory_space<vmem>>, vector<8x128xf32>,
    return
  }
}

</mosaic_0001>

<llo_original>
// kernel: forward.1
$region0: #{forward.1}
  #allocation0 [shape = 'u32[]', space=smem, size = 0x4, offset = 0x4, fixed_abs, tag = 'smem constant byte address 0x4 - core index']
  #allocation1 [shape = 'u32[144,128]{1,0:T(1,128)}', space=vmem, size = 0x12000, scoped, tag = 'internal scratch']
  %s0 = inlined_call_operand.vmem [shape: f32[8,128], index: 0, kind: input, shape index: {}]
  %s1 = inlined_call_operand.hbm [shape: f32[3,128,128], index: 1, kind: input, shape index: {}]
  %s2 = inlined_call_operand.vmem [shape: f32[3,8,128], index: 2, kind: input, shape index: {}]
  %s3 = inlined_call_operand.vmem [shape: f32[8,128], index: 3, kind: output, shape index: {}]
  %s4 = sld [smem:[#allocation0]]
  $region26: #{forward.1} parent=0
    _
  %s6 = ssub.s32 1, %s4
  %s7 = scalar_select 0, %s6, %s4
  $region1: #{forward.1} parent=0
    #allocation2 [shape = 'u8[196608]{0}', space=vmem, size = 0x30000, scoped, tag = 'input window, operand 1, single buffered']
    #allocation3 [shape = 's32[1]{0}', space=sflag, size = 0x4, scoped, tag = 'scoped memory for forward.1']
    %8 = vsyncpa [#allocation3], 0
    // Predicated region
    $region2: #{forward.1} parent=1 // pred_check
      _
    $region3: #{forward.1} parent=1 // pred_check_branch
      %10 = sbr.rel (0) target = $region5
    $region4: #{forward.1} parent=1 // pred_region
      _
    $region5: #{forward.1} parent=1 // pred_fallthru
      _
    // Predicated region
    $region6: #{forward.1} parent=1 // pred_check
      _
    $region7: #{forward.1} parent=1 // pred_check_branch
      %12 = sbr.rel (0) target = $region9
    $region8: #{forward.1} parent=1 // pred_region
      %s14 = ssub.s32 6144, 6144
      %15 = vsyncadd [#allocation3], %s14
      %s16 = sshll.u32 [#allocation2], 4
      %s17 = int_to_ptr.vmem [resolvable:$true] %s16
      %22 = dma.hbm_to_vmem [thread:$0]  %s1, 6144, %s17, [#allocation3], 128, 128, 8
    $region9: #{forward.1} parent=1 // pred_fallthru
      _
    // Predicated region
    $region10: #{forward.1} parent=1 // pred_check
      _
    $region11: #{forward.1} parent=1 // pred_check_branch
      %24 = sbr.rel (0) target = $region13
    $region12: #{forward.1} parent=1 // pred_region
      _
    $region13: #{forward.1} parent=1 // pred_fallthru
      _
    // Predicated region
    $region14: #{forward.1} parent=1 // pred_check
      _
    $region15: #{forward.1} parent=1 // pred_check_branch
      %26 = sbr.rel (0) target = $region17
    $region16: #{forward.1} parent=1 // pred_region
      %27 = dma.done [#allocation3], 6144
    $region17: #{forward.1} parent=1 // pred_fallthru
      _
    %v28 = vld [vmem:[%s0] sm:$0xff]
    %v29 = vld [vmem:[#allocation2] sm:$0xff]
    %v30 = vld [vmem:[#allocation2 + $0x8] sm:$0xff]
    %v31 = vld [vmem:[#allocation2 + $0x10] sm:$0xff]
    %v32 = vld [vmem:[#allocation2 + $0x18] sm:$0xff]
    %v33 = vld [vmem:[#allocation2 + $0x20] sm:$0xff]
    %v34 = vld [vmem:[#allocation2 + $0x28] sm:$0xff]
    %v35 = vld [vmem:[#allocation2 + $0x30] sm:$0xff]
    %v36 = vld [vmem:[#allocation2 + $0x38] sm:$0xff]
    %v37 = vld [vmem:[#allocation2 + $0x40] sm:$0xff]
    %v38 = vld [vmem:[#allocation2 + $0x48] sm:$0xff]
    %v39 = vld [vmem:[#allocation2 + $0x50] sm:$0xff]
    %v40 = vld [vmem:[#allocation2 + $0x58] sm:$0xff]
    %v41 = vld [vmem:[#allocation2 + $0x60] sm:$0xff]
    %v42 = vld [vmem:[#allocation2 + $0x68] sm:$0xff]
    %v43 = vld [vmem:[#allocation2 + $0x70] sm:$0xff]
    %v44 = vld [vmem:[#allocation2 + $0x78] sm:$0xff]
    %v45 = vld [vmem:[%s2] sm:$0xff]
    %46 = vmatprep.subr.mxu0 0.0
    %47 = vmatpush1.msra.mxu0 %v29
    %48 = vmatprep.subr.mxu0 0.0
    %49 = vmatpush1.msra.mxu0 %v30
    %50 = vmatprep.subr.mxu0 0.0
    %51 = vmatpush1.msra.mxu0 %v31
    %52 = vmatprep.subr.mxu0 0.0
    %53 = vmatpush1.msra.mxu0 %v32
    %54 = vmatprep.subr.mxu0 0.0
    %55 = vmatpush1.msra.mxu0 %v33
    %56 = vmatprep.subr.mxu0 0.0
    %57 = vmatpush1.msra.mxu0 %v34
    %58 = vmatprep.subr.mxu0 0.0
    %59 = vmatpush1.msra.mxu0 %v35
    %60 = vmatprep.subr.mxu0 0.0
    %61 = vmatpush1.msra.mxu0 %v36
    %62 = vmatprep.subr.mxu0 0.0
    %63 = vmatpush1.msra.mxu0 %v37
    %64 = vmatprep.subr.mxu0 0.0
    %65 = vmatpush1.msra.mxu0 %v38
    %66 = vmatprep.subr.mxu0 0.0
    %67 = vmatpush1.msra.mxu0 %v39
    %68 = vmatprep.subr.mxu0 0.0
    %69 = vmatpush1.msra.mxu0 %v40
    %70 = vmatprep.subr.mxu0 0.0
    %71 = vmatpush1.msra.mxu0 %v41
    %72 = vmatprep.subr.mxu0 0.0
    %73 = vmatpush1.msra.mxu0 %v42
    %74 = vmatprep.subr.mxu0 0.0
    %75 = vmatpush1.msra.mxu0 %v43
    %76 = vmatprep.subr.mxu0 0.0
    %77 = vmatpush1.msra.mxu0 %v44
    %78 = vmatprep.subr.mxu0 0.0
    %79 = vmatpush1.msra.mxu0 0.0
    %80 = vmatprep.subr.mxu0 0.0
    %81 = vmatpush1.msra.mxu0 0.0
    %82 = vmatprep.subr.mxu0 0.0
    %83 = vmatpush1.msra.mxu0 0.0
    %84 = vmatprep.subr.mxu0 0.0
    %85 = vmatpush1.msra.mxu0 0.0
    %86 = vmatprep.subr.mxu0 0.0
    %87 = vmatpush1.msra.mxu0 0.0
    %88 = vmatprep.subr.mxu0 0.0
    %89 = vmatpush1.msra.mxu0 0.0
    %90 = vmatprep.subr.mxu0 0.0
    %91 = vmatpush1.msra.mxu0 0.0
    %92 = vmatprep.subr.mxu0 0.0
    %93 = vmatpush1.msra.mxu0 0.0
    %94 = vmatprep.subr.mxu0 0.0
    %95 = vmatpush1.msra.mxu0 0.0
    %96 = vmatprep.subr.mxu0 0.0
    %97 = vmatpush1.msra.mxu0 0.0
    %98 = vmatprep.subr.mxu0 0.0
    %99 = vmatpush1.msra.mxu0 0.0
    %100 = vmatprep.subr.mxu0 0.0
    %101 = vmatpush1.msra.mxu0 0.0
    %102 = vmatprep.subr.mxu0 0.0
    %103 = vmatpush1.msra.mxu0 0.0
    %104 = vmatprep.subr.mxu0 0.0
    %105 = vmatpush1.msra.mxu0 0.0
    %106 = vmatprep.subr.mxu0 0.0
    %107 = vmatpush1.msra.mxu0 0.0
    %108 = vmatprep.subr.mxu0 0.0
    %109 = vmatpush1.msra.mxu0 0.0
    %110 = vmatprep.mubr.f32.mxu0 0.0
    %111 = vmatmul.mubr.f32.gmra.mrb[0].mxu0 %v28
    %v112 = vpop.f32.mrb[0].mxu0
    %v113 = vadd.f32 %v45, %v112
    %v114 = vpop.f32.mrb[0].mxu0
    %115 = vdwg.mxu0
    %v116 = vmax.f32 %v113, 0.0
    %s117 = scalar_lea.vmem [#allocation2], 128
    %v118 = vld [vmem:[%s117] sm:$0xff]
    %v119 = vld [vmem:[%s117 + $0x8] sm:$0xff]
    %v120 = vld [vmem:[%s117 + $0x10] sm:$0xff]
    %v121 = vld [vmem:[%s117 + $0x18] sm:$0xff]
    %v122 = vld [vmem:[%s117 + $0x20] sm:$0xff]
    %v123 = vld [vmem:[%s117 + $0x28] sm:$0xff]
    %v124 = vld [vmem:[%s117 + $0x30] sm:$0xff]
    %v125 = vld [vmem:[%s117 + $0x38] sm:$0xff]
    %v126 = vld [vmem:[%s117 + $0x40] sm:$0xff]
    %v127 = vld [vmem:[%s117 + $0x48] sm:$0xff]
    %v128 = vld [vmem:[%s117 + $0x50] sm:$0xff]
    %v129 = vld [vmem:[%s117 + $0x58] sm:$0xff]
    %v130 = vld [vmem:[%s117 + $0x60] sm:$0xff]
    %v131 = vld [vmem:[%s117 + $0x68] sm:$0xff]
    %v132 = vld [vmem:[%s117 + $0x70] sm:$0xff]
    %v133 = vld [vmem:[%s117 + $0x78] sm:$0xff]
    %s134 = scalar_lea.vmem %s2, 8
    %v135 = vld [vmem:[%s134] sm:$0xff]
    %136 = vmatprep.subr.mxu0 0.0
    %137 = vmatpush1.msra.mxu0 %v118
    %138 = vmatprep.subr.mxu0 0.0
    %139 = vmatpush1.msra.mxu0 %v119
    %140 = vmatprep.subr.mxu0 0.0
    %141 = vmatpush1.msra.mxu0 %v120
    %142 = vmatprep.subr.mxu0 0.0
    %143 = vmatpush1.msra.mxu0 %v121
    %144 = vmatprep.subr.mxu0 0.0
    %145 = vmatpush1.msra.mxu0 %v122
    %146 = vmatprep.subr.mxu0 0.0
    %147 = vmatpush1.msra.mxu0 %v123
    %148 = vmatprep.subr.mxu0 0.0
    %149 = vmatpush1.msra.mxu0 %v124
    %150 = vmatprep.subr.mxu0 0.0
    %151 = vmatpush1.msra.mxu0 %v125
    %152 = vmatprep.subr.mxu0 0.0
    %153 = vmatpush1.msra.mxu0 %v126
    %154 = vmatprep.subr.mxu0 0.0
    %155 = vmatpush1.msra.mxu0 %v127
    %156 = vmatprep.subr.mxu0 0.0
    %157 = vmatpush1.msra.mxu0 %v128
    %158 = vmatprep.subr.mxu0 0.0
    %159 = vmatpush1.msra.mxu0 %v129
    %160 = vmatprep.subr.mxu0 0.0
    %161 = vmatpush1.msra.mxu0 %v130
    %162 = vmatprep.subr.mxu0 0.0
    %163 = vmatpush1.msra.mxu0 %v131
    %164 = vmatprep.subr.mxu0 0.0
    %165 = vmatpush1.msra.mxu0 %v132
    %166 = vmatprep.subr.mxu0 0.0
    %167 = vmatpush1.msra.mxu0 %v133
    %168 = vmatprep.subr.mxu0 0.0
    %169 = vmatpush1.msra.mxu0 0.0
    %170 = vmatprep.subr.mxu0 0.0
    %171 = vmatpush1.msra.mxu0 0.0
    %172 = vmatprep.subr.mxu0 0.0
    %173 = vmatpush1.msra.mxu0 0.0
    %174 = vmatprep.subr.mxu0 0.0
    %175 = vmatpush1.msra.mxu0 0.0
    %176 = vmatprep.subr.mxu0 0.0
    %177 = vmatpush1.msra.mxu0 0.0
    %178 = vmatprep.subr.mxu0 0.0
    %179 = vmatpush1.msra.mxu0 0.0
    %180 = vmatprep.subr.mxu0 0.0
    %181 = vmatpush1.msra.mxu0 0.0
    %182 = vmatprep.subr.mxu0 0.0
    %183 = vmatpush1.msra.mxu0 0.0
    %184 = vmatprep.subr.mxu0 0.0
    %185 = vmatpush1.msra.mxu0 0.0
    %186 = vmatprep.subr.mxu0 0.0
    %187 = vmatpush1.msra.mxu0 0.0
    %188 = vmatprep.subr.mxu0 0.0
    %189 = vmatpush1.msra.mxu0 0.0
    %190 = vmatprep.subr.mxu0 0.0
    %191 = vmatpush1.msra.mxu0 0.0
    %192 = vmatprep.subr.mxu0 0.0
    %193 = vmatpush1.msra.mxu0 0.0
    %194 = vmatprep.subr.mxu0 0.0
    %195 = vmatpush1.msra.mxu0 0.0
    %196 = vmatprep.subr.mxu0 0.0
    %197 = vmatpush1.msra.mxu0 0.0
    %198 = vmatprep.subr.mxu0 0.0
    %199 = vmatpush1.msra.mxu0 0.0
    %200 = vmatprep.mubr.f32.mxu0 0.0
    %201 = vmatmul.mubr.f32.gmra.mrb[0].mxu0 %v116
    %v202 = vpop.f32.mrb[0].mxu0
    %v203 = vadd.f32 %v135, %v202
    %v204 = vpop.f32.mrb[0].mxu0
    %205 = vdwg.mxu0
    %v206 = vmax.f32 %v203, 0.0
    %s207 = scalar_lea.vmem [#allocation2], 256
    %v208 = vld [vmem:[%s207] sm:$0xff]
    %v209 = vld [vmem:[%s207 + $0x8] sm:$0xff]
    %v210 = vld [vmem:[%s207 + $0x10] sm:$0xff]
    %v211 = vld [vmem:[%s207 + $0x18] sm:$0xff]
    %v212 = vld [vmem:[%s207 + $0x20] sm:$0xff]
    %v213 = vld [vmem:[%s207 + $0x28] sm:$0xff]
    %v214 = vld [vmem:[%s207 + $0x30] sm:$0xff]
    %v215 = vld [vmem:[%s207 + $0x38] sm:$0xff]
    %v216 = vld [vmem:[%s207 + $0x40] sm:$0xff]
    %v217 = vld [vmem:[%s207 + $0x48] sm:$0xff]
    %v218 = vld [vmem:[%s207 + $0x50] sm:$0xff]
    %v219 = vld [vmem:[%s207 + $0x58] sm:$0xff]
    %v220 = vld [vmem:[%s207 + $0x60] sm:$0xff]
    %v221 = vld [vmem:[%s207 + $0x68] sm:$0xff]
    %v222 = vld [vmem:[%s207 + $0x70] sm:$0xff]
    %v223 = vld [vmem:[%s207 + $0x78] sm:$0xff]
    %s224 = scalar_lea.vmem %s2, 16
    %v225 = vld [vmem:[%s224] sm:$0xff]
    %226 = vmatprep.subr.mxu0 0.0
    %227 = vmatpush1.msra.mxu0 %v208
    %228 = vmatprep.subr.mxu0 0.0
    %229 = vmatpush1.msra.mxu0 %v209
    %230 = vmatprep.subr.mxu0 0.0
    %231 = vmatpush1.msra.mxu0 %v210
    %232 = vmatprep.subr.mxu0 0.0
    %233 = vmatpush1.msra.mxu0 %v211
    %234 = vmatprep.subr.mxu0 0.0
    %235 = vmatpush1.msra.mxu0 %v212
    %236 = vmatprep.subr.mxu0 0.0
    %237 = vmatpush1.msra.mxu0 %v213
    %238 = vmatprep.subr.mxu0 0.0
    %239 = vmatpush1.msra.mxu0 %v214
    %240 = vmatprep.subr.mxu0 0.0
    %241 = vmatpush1.msra.mxu0 %v215
    %242 = vmatprep.subr.mxu0 0.0
    %243 = vmatpush1.msra.mxu0 %v216
    %244 = vmatprep.subr.mxu0 0.0
    %245 = vmatpush1.msra.mxu0 %v217
    %246 = vmatprep.subr.mxu0 0.0
    %247 = vmatpush1.msra.mxu0 %v218
    %248 = vmatprep.subr.mxu0 0.0
    %249 = vmatpush1.msra.mxu0 %v219
    %250 = vmatprep.subr.mxu0 0.0
    %251 = vmatpush1.msra.mxu0 %v220
    %252 = vmatprep.subr.mxu0 0.0
    %253 = vmatpush1.msra.mxu0 %v221
    %254 = vmatprep.subr.mxu0 0.0
    %255 = vmatpush1.msra.mxu0 %v222
    %256 = vmatprep.subr.mxu0 0.0
    %257 = vmatpush1.msra.mxu0 %v223
    %258 = vmatprep.subr.mxu0 0.0
    %259 = vmatpush1.msra.mxu0 0.0
    %260 = vmatprep.subr.mxu0 0.0
    %261 = vmatpush1.msra.mxu0 0.0
    %262 = vmatprep.subr.mxu0 0.0
    %263 = vmatpush1.msra.mxu0 0.0
    %264 = vmatprep.subr.mxu0 0.0
    %265 = vmatpush1.msra.mxu0 0.0
    %266 = vmatprep.subr.mxu0 0.0
    %267 = vmatpush1.msra.mxu0 0.0
    %268 = vmatprep.subr.mxu0 0.0
    %269 = vmatpush1.msra.mxu0 0.0
    %270 = vmatprep.subr.mxu0 0.0
    %271 = vmatpush1.msra.mxu0 0.0
    %272 = vmatprep.subr.mxu0 0.0
    %273 = vmatpush1.msra.mxu0 0.0
    %274 = vmatprep.subr.mxu0 0.0
    %275 = vmatpush1.msra.mxu0 0.0
    %276 = vmatprep.subr.mxu0 0.0
    %277 = vmatpush1.msra.mxu0 0.0
    %278 = vmatprep.subr.mxu0 0.0
    %279 = vmatpush1.msra.mxu0 0.0
    %280 = vmatprep.subr.mxu0 0.0
    %281 = vmatpush1.msra.mxu0 0.0
    %282 = vmatprep.subr.mxu0 0.0
    %283 = vmatpush1.msra.mxu0 0.0
    %284 = vmatprep.subr.mxu0 0.0
    %285 = vmatpush1.msra.mxu0 0.0
    %286 = vmatprep.subr.mxu0 0.0
    %287 = vmatpush1.msra.mxu0 0.0
    %288 = vmatprep.subr.mxu0 0.0
    %289 = vmatpush1.msra.mxu0 0.0
    %290 = vmatprep.mubr.f32.mxu0 0.0
    %291 = vmatmul.mubr.f32.gmra.mrb[0].mxu0 %v206
    %v292 = vpop.f32.mrb[0].mxu0
    %v293 = vadd.f32 %v225, %v292
    %v294 = vpop.f32.mrb[0].mxu0
    %295 = vdwg.mxu0
    %296 = vst [vmem:[%s3] sm:$0xff] %v293
    // Predicated region
    $region18: #{forward.1} parent=1 // pred_check
      _
    $region19: #{forward.1} parent=1 // pred_check_branch
      %298 = sbr.rel (0) target = $region21
    $region20: #{forward.1} parent=1 // pred_region
      _
    $region21: #{forward.1} parent=1 // pred_fallthru
      _
    // Predicated region
    $region22: #{forward.1} parent=1 // pred_check
      _
    $region23: #{forward.1} parent=1 // pred_check_branch
      %300 = sbr.rel (0) target = $region25
    $region24: #{forward.1} parent=1 // pred_region
      _
    $region25: #{forward.1} parent=1 // pred_fallthru
      _
    %301 = vsyncpa [#allocation3], 1

</llo_original>
